<compile_context>
chip_gen: v6e
topology: v6e:2x2x1
jax: 0.10.0
libtpu: 0.0.40
codegen_flags: <defaults>
</compile_context>

<pallas_src>
import jax
import jax.numpy as jnp
from jax.experimental import pallas as pl
from jax.experimental.pallas import tpu as pltpu


# ----------------------------------------------------------------------------
# Pallas kernels (single fused step over all channels, grid=())
# ----------------------------------------------------------------------------
def _normalize_kernel(x_ref, ubd_ref, qbd_ref, xn_ref, th_ref):
    # x_ref : (B, C*Lin)   ubd_ref : (C*Lin, C*R)   qbd_ref : (C*Lin, C*Lin)
    x = x_ref[...]
    # Two independent MXU passes (no serial theta -> x_stat -> subtract chain):
    th_ref[...] = jnp.dot(x, ubd_ref[...], preferred_element_type=jnp.float32)
    xn_ref[...] = jnp.dot(x, qbd_ref[...], preferred_element_type=jnp.float32)


def _denormalize_kernel(x_ref, th_ref, vbd_ref, y_ref):
    # x_ref : (B, C*Lout)  th_ref : (B, C*R)  vbd_ref : (C*R, C*Lout)
    # vbd_ref already has the diagonal phi and the scalar `scale` folded in.
    y_ref[...] = x_ref[...] + jnp.dot(th_ref[...], vbd_ref[...],
                                      preferred_element_type=jnp.float32)


def _vmem_spec():
    return pl.BlockSpec(memory_space=pltpu.MemorySpace.VMEM)


# ----------------------------------------------------------------------------
# Wrappers (dense 2D layout; only free contiguous reshapes around the calls)
# ----------------------------------------------------------------------------
@jax.jit
def sin_normalize(x_bcl, u_bd, q_bd):
    """x_bcl: (B, C, Lin) f32, u_bd: (C*Lin, C*R), q_bd: (C*Lin, C*Lin).

    Returns (x_norm: (B, C, Lin), theta: (B, C, R))."""
    B, C, Lin = x_bcl.shape
    CR = u_bd.shape[1]
    R = CR // C
    x_flat = x_bcl.reshape(B, C * Lin)          # contiguous reshape, no transpose
    xn_flat, th_flat = pl.pallas_call(
        _normalize_kernel,
        out_shape=(jax.ShapeDtypeStruct((B, C * Lin), jnp.float32),
                   jax.ShapeDtypeStruct((B, CR), jnp.float32)),
        in_specs=[_vmem_spec(), _vmem_spec(), _vmem_spec()],
        out_specs=(_vmem_spec(), _vmem_spec()),
    )(x_flat, u_bd, q_bd)
    return xn_flat.reshape(B, C, Lin), th_flat.reshape(B, C, R)


@jax.jit
def sin_denormalize(x_bcl, theta_bcr, vs_bd):
    """x_bcl: (B, C, Lout), theta_bcr: (B, C, R), vs_bd: (C*R, C*Lout)
    (scale and phi folded in at init).  Returns y: (B, C, Lout)."""
    B, C, Lout = x_bcl.shape
    R = theta_bcr.shape[-1]
    x_flat = x_bcl.reshape(B, C * Lout)
    th_flat = theta_bcr.reshape(B, C * R)
    y_flat = pl.pallas_call(
        _denormalize_kernel,
        out_shape=jax.ShapeDtypeStruct((B, C * Lout), jnp.float32),
        in_specs=[_vmem_spec(), _vmem_spec(), _vmem_spec()],
        out_specs=_vmem_spec(),
        input_output_aliases={0: 0},            # y reuses x_dec's buffer
    )(x_flat, th_flat, vs_bd)
    return y_flat.reshape(B, C, Lout)


# ----------------------------------------------------------------------------
# Deterministic parameter construction (mirrors SIN.__init__, synthetic data)
# ----------------------------------------------------------------------------
# TODO(synk): covariance accumulation + SVD is init-time buffer setup (not the
# forward pass); it stays in plain JAX/XLA rather than Pallas.
def build_sin_params(key, seq_len, pred_len, num_features,
                     n_batches=3, batch_size=4, threshold=None):
    if threshold is None:
        threshold = 0.05 * max(seq_len, pred_len)

    kx, ky = jax.random.split(key)
    xs = jax.random.normal(kx, (n_batches, batch_size, seq_len, num_features),
                           dtype=jnp.float32)
    ys = jax.random.normal(ky, (n_batches, batch_size, pred_len, num_features),
                           dtype=jnp.float32)

    u_list, v_list, phi_list, ranks = [], [], [], []
    for c in range(num_features):
        cov = jnp.zeros((seq_len, pred_len), dtype=jnp.float32)
        for b in range(n_batches):
            x_c = xs[b, ..., c]                       # (bs, seq_len)
            y_c = ys[b, ..., c]                       # (bs, pred_len)
            cov = cov + jnp.matmul(x_c.T, y_c[:, -pred_len:])
        cov = cov / n_batches

        U, S, Vh = jnp.linalg.svd(cov, full_matrices=False)
        r = int(jnp.sum(S > threshold))
        r_eff = max(r, 1)                             # r == 0 fallback in module
        u_list.append(U[:, :r_eff])                   # (seq_len, r_eff)
        v_list.append(Vh[:r_eff, :].T)                # (pred_len, r_eff)
        phi_list.append(jnp.ones((r_eff,), dtype=jnp.float32))
        ranks.append(r_eff)

    r_max = max(ranks)
    scale = float(jnp.sqrt(jnp.float32(pred_len) / jnp.float32(seq_len)))

    C = num_features
    # Block-diagonal factors built ONCE at init (hot path never touches them
    # per-channel, and scale*phi is folded into Vs_bd here, not per call).
    u_bd = jnp.zeros((C * seq_len, C * r_max), dtype=jnp.float32)
    vs_bd = jnp.zeros((C * r_max, C * pred_len), dtype=jnp.float32)
    for c in range(C):
        r_c = ranks[c]
        u_bd = u_bd.at[c * seq_len:(c + 1) * seq_len,
                       c * r_max:c * r_max + r_c].set(u_list[c])
        vs_blk = scale * (phi_list[c][:, None] * v_list[c].T)   # (r_c, pred_len)
        vs_bd = vs_bd.at[c * r_max:c * r_max + r_c,
                         c * pred_len:(c + 1) * pred_len].set(vs_blk)
    # Projector: x_norm = x @ (I - U U^T), block-diagonal by construction.
    q_bd = jnp.eye(C * seq_len, dtype=jnp.float32) - u_bd @ u_bd.T

    return dict(u_list=u_list, v_list=v_list, phi_list=phi_list, ranks=ranks,
                r_max=r_max, scale=scale, u_bd=u_bd, q_bd=q_bd, vs_bd=vs_bd)


# ----------------------------------------------------------------------------
# Plain-JAX reference of the PyTorch math (per-channel, for comparison)
# ----------------------------------------------------------------------------
def ref_normalize(x_bcl, u_list):
    outs, thetas = [], []
    for c in range(x_bcl.shape[1]):
        x_c = x_bcl[:, c, :]                          # (B, Lin)
        th = x_c @ u_list[c]                          # (B, r_c)
        outs.append(x_c - th @ u_list[c].T)
        thetas.append(th)
    return jnp.stack(outs, axis=1), thetas            # (B, C, Lin)


def ref_denormalize(x_bcl, thetas, phi_list, v_list, scale):
    outs = []
    for c in range(x_bcl.shape[1]):
        th_y = thetas[c] * phi_list[c]
        outs.append(x_bcl[:, c, :] + scale * (th_y @ v_list[c].T))
    return jnp.stack(outs, axis=1)                    # (B, C, Lout)


# ----------------------------------------------------------------------------
if __name__ == "__main__":
    SEQ_LEN = 16      # input_sequence_length
    PRED_LEN = 8      # output_sequence_length
    C = 4             # num_features
    B = 8             # batch (fills all 8 sublanes)

    key = jax.random.PRNGKey(0)
    k_params, k_x, k_y = jax.random.split(key, 3)

    params = build_sin_params(k_params, SEQ_LEN, PRED_LEN, C)

    # forward(mode='norm')
    x = jax.random.normal(k_x, (B, C, SEQ_LEN), dtype=jnp.float32)
    x_norm, theta = sin_normalize(x, params["u_bd"], params["q_bd"])
    jax.block_until_ready((x_norm, theta))

    # forward(mode='denorm') -- x_dec plays the role of the model output.
    x_dec = jax.random.normal(k_y, (B, C, PRED_LEN), dtype=jnp.float32)
    y_out = sin_denormalize(x_dec, theta, params["vs_bd"])
    y_out = jax.block_until_ready(y_out)

    # correctness check against plain-JAX reference of the PyTorch math
    xn_ref, th_ref = ref_normalize(x, params["u_list"])
    y_ref = ref_denormalize(x_dec, th_ref, params["phi_list"],
                            params["v_list"], params["scale"])

    assert jnp.allclose(x_norm, xn_ref, atol=1e-4, rtol=1e-4)
    for c in range(C):
        r_c = params["ranks"][c]
        assert jnp.allclose(theta[:, c, :r_c], th_ref[c], atol=1e-4, rtol=1e-4)
        # padded theta columns must be exactly zero (zero-padded U_bd columns)
        assert jnp.allclose(theta[:, c, r_c:], 0.0, atol=1e-6)
    assert jnp.allclose(y_out, y_ref, atol=1e-4, rtol=1e-4)

    print("KERNEL_OK")
</pallas_src>

<mosaic_0001>
module attributes {stable_mosaic.version = 11 : i64} {
  func.func @_normalize_kernel(%arg0: memref<8x64xf32, #tpu.memory_space<vmem>>, %arg1: memref<64x28xf32, #tpu.memory_space<vmem>>, %arg2: memref<64x64xf32, #tpu.memory_space<vmem>>, %arg3: memref<8x64xf32, #tpu.memory_space<vmem>>, %arg4: memref<8x28xf32, #tpu.memory_space<vmem>>) attributes {dimension_semantics = [], scalar_prefetch = 0 : i64, scratch_operands = 0 : i64, tpu.core_type = #tpu.core_type<tc>} {
    %c0 = arith.constant 0 : index
    %c0_0 = arith.constant 0 : index
    %0 = vector.load %arg0[%c0, %c0_0] : memref<8x64xf32, #tpu.memory_space<vmem>>, vector<8x64xf32>
    %c0_1 = arith.constant 0 : index
    %c0_2 = arith.constant 0 : index
    %1 = vector.load %arg1[%c0_1, %c0_2] : memref<64x28xf32, #tpu.memory_space<vmem>>, vector<64x28xf32>
    %cst = arith.constant dense<0.000000e+00> : vector<8x28xf32>
    %2 = tpu.matmul %0, %1, %cst {dimension_numbers = #tpu.dot_dimension_numbers<[1], [0], [0], [1], [0, 0, 1, 1], [], []>} : vector<8x64xf32>, vector<64x28xf32>, vector<8x28xf32> -> vector<8x28xf32>
    %c0_3 = arith.constant 0 : index
    %c0_4 = arith.constant 0 : index
    %3 = vector.load %arg4[%c0_3, %c0_4] : memref<8x28xf32, #tpu.memory_space<vmem>>, vector<8x28xf32>
    tpu.vector_store %arg4[%c0_3, %c0_4], %2 {strides = array<i32>} : memref<8x28xf32, #tpu.memory_space<vmem>>, vector<8x28xf32>,
    %c0_5 = arith.constant 0 : index
    %c0_6 = arith.constant 0 : index
    %4 = vector.load %arg2[%c0_5, %c0_6] : memref<64x64xf32, #tpu.memory_space<vmem>>, vector<64x64xf32>
    %cst_7 = arith.constant dense<0.000000e+00> : vector<8x64xf32>
    %5 = tpu.matmul %0, %4, %cst_7 {dimension_numbers = #tpu.dot_dimension_numbers<[1], [0], [0], [1], [0, 0, 1, 1], [], []>} : vector<8x64xf32>, vector<64x64xf32>, vector<8x64xf32> -> vector<8x64xf32>
    %c0_8 = arith.constant 0 : index
    %c0_9 = arith.constant 0 : index
    %6 = vector.load %arg3[%c0_8, %c0_9] : memref<8x64xf32, #tpu.memory_space<vmem>>, vector<8x64xf32>
    tpu.vector_store %arg3[%c0_8, %c0_9], %5 {strides = array<i32>} : memref<8x64xf32, #tpu.memory_space<vmem>>, vector<8x64xf32>,
    return
  }
}

</mosaic_0001>

<llo_original>
// kernel: sin_normalize.1
$region0: #{sin_normalize.1}
  #allocation0 [shape = 'u32[]', space=smem, size = 0x4, offset = 0x4, fixed_abs, tag = 'smem constant byte address 0x4 - core index']
  #allocation1 [shape = 'u32[144,128]{1,0:T(1,128)}', space=vmem, size = 0x12000, scoped, tag = 'internal scratch']
  %s0 = inlined_call_operand.vmem [shape: f32[8,64], index: 0, kind: input, shape index: {}]
  %s1 = inlined_call_operand.vmem [shape: f32[64,28], index: 1, kind: input, shape index: {}]
  %s2 = inlined_call_operand.vmem [shape: f32[64,64], index: 2, kind: input, shape index: {}]
  %s3 = inlined_call_operand.vmem [shape: f32[8,64], index: 3, kind: output, shape index: {0}]
  %s4 = inlined_call_operand.vmem [shape: f32[8,28], index: 4, kind: output, shape index: {1}]
  %5 = xla_tuple %s3, %s4
  %s6 = sld [smem:[#allocation0]]
  $region30: #{sin_normalize.1} parent=0
    _
  %s8 = ssub.s32 1, %s6
  %s9 = scalar_select 0, %s8, %s6
  // Predicated region
  $region2: #{sin_normalize.1} parent=0 // pred_check
    _
  $region3: #{sin_normalize.1} parent=0 // pred_check_branch
    %11 = sbr.rel (0) target = $region5
  $region4: #{sin_normalize.1} parent=0 // pred_region
    _
  $region5: #{sin_normalize.1} parent=0 // pred_fallthru
    _
  // Predicated region
  $region6: #{sin_normalize.1} parent=0 // pred_check
    _
  $region7: #{sin_normalize.1} parent=0 // pred_check_branch
    %13 = sbr.rel (0) target = $region9
  $region8: #{sin_normalize.1} parent=0 // pred_region
    _
  $region9: #{sin_normalize.1} parent=0 // pred_fallthru
    _
  // Predicated region
  $region10: #{sin_normalize.1} parent=0 // pred_check
    _
  $region11: #{sin_normalize.1} parent=0 // pred_check_branch
    %15 = sbr.rel (0) target = $region13
  $region12: #{sin_normalize.1} parent=0 // pred_region
    _
  $region13: #{sin_normalize.1} parent=0 // pred_fallthru
    _
  %v16 = vld [vmem:[%s0] sm:$0xff]
  %v17 = vld [vmem:[%s1] sm:$0xff]
  %v18 = vld [vmem:[%s1 + $0x8] sm:$0xff]
  %v19 = vld [vmem:[%s1 + $0x10] sm:$0xff]
  %v20 = vld [vmem:[%s1 + $0x18] sm:$0xff]
  %v21 = vld [vmem:[%s1 + $0x20] sm:$0xff]
  %v22 = vld [vmem:[%s1 + $0x28] sm:$0xff]
  %v23 = vld [vmem:[%s1 + $0x30] sm:$0xff]
  %v24 = vld [vmem:[%s1 + $0x38] sm:$0xff]
  %vm25 = vcmask 523264
  %v27 = vsel %vm25, %v16, 0
  %29 = vmatprep.subr.mxu0 0.0
  %30 = vmatpush1.msra.mxu0 0.0
  %31 = vmatprep.subr.mxu0 0.0
  %32 = vmatpush1.msra.mxu0 0.0
  %33 = vmatprep.subr.mxu0 0.0
  %34 = vmatpush1.msra.mxu0 0.0
  %35 = vmatprep.subr.mxu0 0.0
  %36 = vmatpush1.msra.mxu0 0.0
  %37 = vmatprep.subr.mxu0 0.0
  %38 = vmatpush1.msra.mxu0 0.0
  %39 = vmatprep.subr.mxu0 0.0
  %40 = vmatpush1.msra.mxu0 0.0
  %41 = vmatprep.subr.mxu0 0.0
  %42 = vmatpush1.msra.mxu0 0.0
  %43 = vmatprep.subr.mxu0 0.0
  %44 = vmatpush1.msra.mxu0 0.0
  %45 = vmatprep.subr.mxu0 0.0
  %46 = vmatpush1.msra.mxu0 %v24
  %47 = vmatprep.subr.mxu0 0.0
  %48 = vmatpush1.msra.mxu0 %v23
  %49 = vmatprep.subr.mxu0 0.0
  %50 = vmatpush1.msra.mxu0 %v22
  %51 = vmatprep.subr.mxu0 0.0
  %52 = vmatpush1.msra.mxu0 %v21
  %53 = vmatprep.subr.mxu0 0.0
  %54 = vmatpush1.msra.mxu0 %v20
  %55 = vmatprep.subr.mxu0 0.0
  %56 = vmatpush1.msra.mxu0 %v19
  %57 = vmatprep.subr.mxu0 0.0
  %58 = vmatpush1.msra.mxu0 %v18
  %59 = vmatprep.subr.mxu0 0.0
  %60 = vmatpush1.msra.mxu0 %v17
  %61 = vmatprep.subr.mxu0 0.0
  %62 = vmatpush2.msra.mxu0 0.0
  %63 = vmatprep.subr.mxu0 0.0
  %64 = vmatpush2.msra.mxu0 0.0
  %65 = vmatprep.subr.mxu0 0.0
  %66 = vmatpush2.msra.mxu0 0.0
  %67 = vmatprep.subr.mxu0 0.0
  %68 = vmatpush2.msra.mxu0 0.0
  %69 = vmatprep.subr.mxu0 0.0
  %70 = vmatpush2.msra.mxu0 0.0
  %71 = vmatprep.subr.mxu0 0.0
  %72 = vmatpush2.msra.mxu0 0.0
  %73 = vmatprep.subr.mxu0 0.0
  %74 = vmatpush2.msra.mxu0 0.0
  %75 = vmatprep.subr.mxu0 0.0
  %76 = vmatpush2.msra.mxu0 0.0
  %77 = vmatprep.subr.mxu0 0.0
  %78 = vmatpush2.msra.mxu0 0.0
  %79 = vmatprep.subr.mxu0 0.0
  %80 = vmatpush2.msra.mxu0 0.0
  %81 = vmatprep.subr.mxu0 0.0
  %82 = vmatpush2.msra.mxu0 0.0
  %83 = vmatprep.subr.mxu0 0.0
  %84 = vmatpush2.msra.mxu0 0.0
  %85 = vmatprep.subr.mxu0 0.0
  %86 = vmatpush2.msra.mxu0 0.0
  %87 = vmatprep.subr.mxu0 0.0
  %88 = vmatpush2.msra.mxu0 0.0
  %89 = vmatprep.subr.mxu0 0.0
  %90 = vmatpush2.msra.mxu0 0.0
  %91 = vmatprep.subr.mxu0 0.0
  %92 = vmatpush2.msra.mxu0 0.0
  %93 = vmatprep.mubr.f32.mxu0 0.0
  %94 = vmatmul.mubr.f32.gmra.mxu0 %v27
  %v95 = vpop.f32.mrf.mxu0
  %v96 = vadd.f32 0.0, %v95
  %v97 = vpop.f32.mrf.mxu0
  %98 = vdwg.mxu0
  %vm99 = vcmask 228352
  %100 = vst.msk [vmem:[%s4] sm:$0xff] %vm99, %v96
  %v101 = vld [vmem:[%s2] sm:$0xff]
  %v102 = vld [vmem:[%s2 + $0x8] sm:$0xff]
  %v103 = vld [vmem:[%s2 + $0x10] sm:$0xff]
  %v104 = vld [vmem:[%s2 + $0x18] sm:$0xff]
  %v105 = vld [vmem:[%s2 + $0x20] sm:$0xff]
  %v106 = vld [vmem:[%s2 + $0x28] sm:$0xff]
  %v107 = vld [vmem:[%s2 + $0x30] sm:$0xff]
  %v108 = vld [vmem:[%s2 + $0x38] sm:$0xff]
  %109 = vmatprep.subr.mxu0 0.0
  %110 = vmatpush1.msra.mxu0 0.0
  %111 = vmatprep.subr.mxu0 0.0
  %112 = vmatpush1.msra.mxu0 0.0
  %113 = vmatprep.subr.mxu0 0.0
  %114 = vmatpush1.msra.mxu0 0.0
  %115 = vmatprep.subr.mxu0 0.0
  %116 = vmatpush1.msra.mxu0 0.0
  %117 = vmatprep.subr.mxu0 0.0
  %118 = vmatpush1.msra.mxu0 0.0
  %119 = vmatprep.subr.mxu0 0.0
  %120 = vmatpush1.msra.mxu0 0.0
  %121 = vmatprep.subr.mxu0 0.0
  %122 = vmatpush1.msra.mxu0 0.0
  %123 = vmatprep.subr.mxu0 0.0
  %124 = vmatpush1.msra.mxu0 0.0
  %125 = vmatprep.subr.mxu0 0.0
  %126 = vmatpush1.msra.mxu0 %v108
  %127 = vmatprep.subr.mxu0 0.0
  %128 = vmatpush1.msra.mxu0 %v107
  %129 = vmatprep.subr.mxu0 0.0
  %130 = vmatpush1.msra.mxu0 %v106
  %131 = vmatprep.subr.mxu0 0.0
  %132 = vmatpush1.msra.mxu0 %v105
  %133 = vmatprep.subr.mxu0 0.0
  %134 = vmatpush1.msra.mxu0 %v104
  %135 = vmatprep.subr.mxu0 0.0
  %136 = vmatpush1.msra.mxu0 %v103
  %137 = vmatprep.subr.mxu0 0.0
  %138 = vmatpush1.msra.mxu0 %v102
  %139 = vmatprep.subr.mxu0 0.0
  %140 = vmatpush1.msra.mxu0 %v101
  %141 = vmatprep.subr.mxu0 0.0
  %142 = vmatpush2.msra.mxu0 0.0
  %143 = vmatprep.subr.mxu0 0.0
  %144 = vmatpush2.msra.mxu0 0.0
  %145 = vmatprep.subr.mxu0 0.0
  %146 = vmatpush2.msra.mxu0 0.0
  %147 = vmatprep.subr.mxu0 0.0
  %148 = vmatpush2.msra.mxu0 0.0
  %149 = vmatprep.subr.mxu0 0.0
  %150 = vmatpush2.msra.mxu0 0.0
  %151 = vmatprep.subr.mxu0 0.0
  %152 = vmatpush2.msra.mxu0 0.0
  %153 = vmatprep.subr.mxu0 0.0
  %154 = vmatpush2.msra.mxu0 0.0
  %155 = vmatprep.subr.mxu0 0.0
  %156 = vmatpush2.msra.mxu0 0.0
  %157 = vmatprep.subr.mxu0 0.0
  %158 = vmatpush2.msra.mxu0 0.0
  %159 = vmatprep.subr.mxu0 0.0
  %160 = vmatpush2.msra.mxu0 0.0
  %161 = vmatprep.subr.mxu0 0.0
  %162 = vmatpush2.msra.mxu0 0.0
  %163 = vmatprep.subr.mxu0 0.0
  %164 = vmatpush2.msra.mxu0 0.0
  %165 = vmatprep.subr.mxu0 0.0
  %166 = vmatpush2.msra.mxu0 0.0
  %167 = vmatprep.subr.mxu0 0.0
  %168 = vmatpush2.msra.mxu0 0.0
  %169 = vmatprep.subr.mxu0 0.0
  %170 = vmatpush2.msra.mxu0 0.0
  %171 = vmatprep.subr.mxu0 0.0
  %172 = vmatpush2.msra.mxu0 0.0
  %173 = vmatprep.mubr.f32.mxu0 0.0
  %174 = vmatmul.mubr.f32.gmra.mxu0 %v27
  %v175 = vpop.f32.mrf.mxu0
  %v176 = vadd.f32 0.0, %v175
  %v177 = vpop.f32.mrf.mxu0
  %178 = vdwg.mxu0
  %179 = vst.msk [vmem:[%s3] sm:$0xff] %vm25, %v176
  // Predicated region
  $region14: #{sin_normalize.1} parent=0 // pred_check
    _
  $region15: #{sin_normalize.1} parent=0 // pred_check_branch
    %181 = sbr.rel (0) target = $region17
  $region16: #{sin_normalize.1} parent=0 // pred_region
    _
  $region17: #{sin_normalize.1} parent=0 // pred_fallthru
    _
  // Predicated region
  $region18: #{sin_normalize.1} parent=0 // pred_check
    _
  $region19: #{sin_normalize.1} parent=0 // pred_check_branch
    %183 = sbr.rel (0) target = $region21
  $region20: #{sin_normalize.1} parent=0 // pred_region
    _
  $region21: #{sin_normalize.1} parent=0 // pred_fallthru
    _
  // Predicated region
  $region22: #{sin_normalize.1} parent=0 // pred_check
    _
  $region23: #{sin_normalize.1} parent=0 // pred_check_branch
    %185 = sbr.rel (0) target = $region25
  $region24: #{sin_normalize.1} parent=0 // pred_region
    _
  $region25: #{sin_normalize.1} parent=0 // pred_fallthru
    _
  // Predicated region
  $region26: #{sin_normalize.1} parent=0 // pred_check
    _
  $region27: #{sin_normalize.1} parent=0 // pred_check_branch
    %187 = sbr.rel (0) target = $region29
  $region28: #{sin_normalize.1} parent=0 // pred_region
    _
  $region29: #{sin_normalize.1} parent=0 // pred_fallthru
    _

</llo_original>
